<compile_context>
chip_gen: v6e
topology: v6e:2x2x1
jax: 0.10.0
libtpu: 0.0.40
codegen_flags: <defaults>
</compile_context>

<pallas_src>
import jax
import jax.numpy as jnp
from jax.experimental import pallas as pl
from jax.experimental.pallas import tpu as pltpu


_SMALL_ROW_BYTES = 512        # below this, strided HBM reads waste bandwidth
_MAX_INFLIGHT_DMAS = 8        # concurrent HBM->HBM copies per grid step
_VMEM_BLOCK_BUDGET = 8 << 20  # per-step block budget, safe on all generations


def _round_up(v, m):
    return -(-v // m) * m


def _slice_hbm_to_hbm(x, h_start, w_start, out_h, out_w):
    """Wide-row path: direct strided HBM->HBM copies, no VMEM staging."""
    n, c, h, w = x.shape

    num_chunks = min(_MAX_INFLIGHT_DMAS, c)
    cb = -(-c // num_chunks)          # channels per chunk (ceil)
    num_chunks = -(-c // cb)          # actual number of chunks

    def kernel(x_hbm, o_hbm, sems):
        b = pl.program_id(0)
        copies = []
        # Start every chunk copy first (num_chunks DMAs in flight), then
        # wait: descriptor-issue latency overlaps the transfers instead of
        # serializing with them.
        for k in range(num_chunks):   # static unroll
            c0 = k * cb
            csz = min(cb, c - c0)
            cp = pltpu.make_async_copy(
                x_hbm.at[pl.ds(b, 1), pl.ds(c0, csz),
                         pl.ds(h_start, out_h), pl.ds(w_start, out_w)],
                o_hbm.at[pl.ds(b, 1), pl.ds(c0, csz),
                         pl.ds(0, out_h), pl.ds(0, out_w)],
                sems.at[k],
            )
            cp.start()
            copies.append(cp)
        for cp in copies:
            cp.wait()

    return pl.pallas_call(
        kernel,
        out_shape=jax.ShapeDtypeStruct((n, c, out_h, out_w), x.dtype),
        grid=(n,),
        in_specs=[pl.BlockSpec(memory_space=pl.ANY)],
        out_specs=pl.BlockSpec(memory_space=pl.ANY),
        scratch_shapes=[pltpu.SemaphoreType.DMA((num_chunks,))],
        compiler_params=pltpu.CompilerParams(
            dimension_semantics=("parallel",)),
    )(x)


def _slice_vmem_staged(x, h_start, w_start, out_h, out_w):
    """Narrow-row path: full-width blocks through VMEM + in-VMEM slice."""
    n, c, h, w = x.shape
    itemsize = jnp.dtype(x.dtype).itemsize

    # Per-channel VMEM cost of one grid step: double-buffered full-width
    # input block + double-buffered lane-padded output block.
    per_ch = (2 * _round_up(h, 8) * _round_up(w, 128)
              + 2 * _round_up(out_h, 8) * _round_up(out_w, 128)) * itemsize
    cb = max(1, min(c, _VMEM_BLOCK_BUDGET // per_ch))
    while c % cb != 0:                 # keep channel blocks exact
        cb -= 1

    def kernel(x_ref, o_ref):
        # Static (h_start, w_start) offsets applied in VMEM; the sublane/lane
        # shifts and masked stores run on otherwise-idle units (mem-bound).
        o_ref[...] = x_ref[:, :, h_start:h_start + out_h,
                           w_start:w_start + out_w]

    return pl.pallas_call(
        kernel,
        out_shape=jax.ShapeDtypeStruct((n, c, out_h, out_w), x.dtype),
        grid=(n, c // cb),
        # Full H/W (and full out_h/out_w) in the trailing block dims keeps the
        # (8,128) divisibility rule satisfied for any spatial size.
        in_specs=[pl.BlockSpec((1, cb, h, w), lambda b, cbk: (b, cbk, 0, 0))],
        out_specs=pl.BlockSpec((1, cb, out_h, out_w),
                               lambda b, cbk: (b, cbk, 0, 0)),
        compiler_params=pltpu.CompilerParams(
            dimension_semantics=("parallel", "parallel")),
    )(x)


def slice_layer(x: jax.Array,
                height_slice: slice = slice(1, None),
                width_slice: slice = slice(1, None)) -> jax.Array:
    """Pallas TPU implementation of SliceLayer.forward (NCHW)."""
    n, c, h, w = x.shape

    h_start, h_stop, h_step = height_slice.indices(h)
    w_start, w_stop, w_step = width_slice.indices(w)
    if h_step != 1 or w_step != 1:
        raise NotImplementedError("only unit-stride slices supported")
    out_h = max(h_stop - h_start, 0)
    out_w = max(w_stop - w_start, 0)

    if n == 0 or c == 0 or out_h == 0 or out_w == 0:
        # Degenerate slice: PyTorch returns an empty tensor.
        return jnp.zeros((n, c, out_h, out_w), x.dtype)

    if out_w * jnp.dtype(x.dtype).itemsize >= _SMALL_ROW_BYTES:
        return _slice_hbm_to_hbm(x, h_start, w_start, out_h, out_w)
    return _slice_vmem_staged(x, h_start, w_start, out_h, out_w)


if __name__ == "__main__":
    key = jax.random.PRNGKey(0)
    k1, k2 = jax.random.split(key)

    # Primary demo shape (matches the PyTorch module defaults): NCHW.
    x = jax.random.normal(k1, (2, 4, 16, 16), dtype=jnp.float32)
    y = jax.block_until_ready(slice_layer(x))
    ref = x[:, :, 1:, 1:]
    assert y.shape == (2, 4, 15, 15), y.shape
    assert jnp.array_equal(y, ref), "VMEM-staged path mismatch"

    # Wider rows exercise the direct HBM->HBM path as well.
    x_wide = jax.random.normal(k2, (2, 8, 16, 256), dtype=jnp.float32)
    y_wide = jax.block_until_ready(slice_layer(x_wide))
    ref_wide = x_wide[:, :, 1:, 1:]
    assert y_wide.shape == (2, 8, 15, 255), y_wide.shape
    assert jnp.array_equal(y_wide, ref_wide), "HBM->HBM path mismatch"

    print("KERNEL_OK")
</pallas_src>

<mosaic_0001>
module attributes {stable_mosaic.version = 11 : i64} {
  func.func @kernel(%arg0: i32, %arg1: i32, %arg2: memref<1x4x16x16xf32, #tpu.memory_space<vmem>>, %arg3: memref<1x4x15x15xf32, #tpu.memory_space<vmem>>) attributes {dimension_semantics = [#tpu.dimension_semantics<parallel>, #tpu.dimension_semantics<parallel>], iteration_bounds = array<i64: 2, 1>, scalar_prefetch = 0 : i64, scratch_operands = 0 : i64, tpu.core_type = #tpu.core_type<tc>, window_params = [{transform_indices = @transform_0, window_bounds = array<i64: 1, 4, 16, 16>}, {transform_indices = @transform_1, window_bounds = array<i64: 1, 4, 15, 15>}]} {
    %c0 = arith.constant 0 : index
    %c0_0 = arith.constant 0 : index
    %c1 = arith.constant 1 : index
    %c1_1 = arith.constant 1 : index
    %0 = vector.load %arg2[%c0, %c0_0, %c1, %c1_1] : memref<1x4x16x16xf32, #tpu.memory_space<vmem>>, vector<1x4x15x15xf32>
    %c0_2 = arith.constant 0 : index
    %c0_3 = arith.constant 0 : index
    %c0_4 = arith.constant 0 : index
    %c0_5 = arith.constant 0 : index
    %1 = vector.load %arg3[%c0_2, %c0_3, %c0_4, %c0_5] : memref<1x4x15x15xf32, #tpu.memory_space<vmem>>, vector<1x4x15x15xf32>
    tpu.vector_store %arg3[%c0_2, %c0_3, %c0_4, %c0_5], %0 {strides = array<i32>} : memref<1x4x15x15xf32, #tpu.memory_space<vmem>>, vector<1x4x15x15xf32>,
    return
  }
  func.func @transform_0(%arg0: i32, %arg1: i32) -> (i32, i32, i32, i32) {
    %c0_i32 = arith.constant 0 : i32
    %c0_i32_0 = arith.constant 0 : i32
    %c0_i32_1 = arith.constant 0 : i32
    return %arg0, %arg1, %c0_i32, %c0_i32_0 : i32, i32, i32, i32
  }
  func.func @transform_1(%arg0: i32, %arg1: i32) -> (i32, i32, i32, i32) {
    %c0_i32 = arith.constant 0 : i32
    %c0_i32_0 = arith.constant 0 : i32
    %c0_i32_1 = arith.constant 0 : i32
    return %arg0, %arg1, %c0_i32, %c0_i32_0 : i32, i32, i32, i32
  }
}

</mosaic_0001>

<llo_original>
// kernel: tpu_custom_call.1
$region0: #{tpu_custom_call.1}
  #allocation0 [shape = 'u32[]', space=smem, size = 0x4, offset = 0x4, fixed_abs, tag = 'smem constant byte address 0x4 - core index']
  #allocation1 [shape = 'u32[144,128]{1,0:T(1,128)}', space=vmem, size = 0x12000, scoped, tag = 'internal scratch']
  %s0 = inlined_call_operand.hbm [shape: f32[2,4,16,16], index: 0, kind: input, shape index: {}]
  %s1 = inlined_call_operand.vmem [shape: f32[2,4,15,15], index: 1, kind: output, shape index: {}]
  %s2 = sld [smem:[#allocation0]]
  $region41: #{tpu_custom_call.1} parent=0
    _
  %s4 = ssub.s32 1, %s2
  %s5 = scalar_select 0, %s4, %s2
  $region1: #{tpu_custom_call.1} parent=0
    #allocation2 [shape = 'u8[65536]{0}', space=vmem, size = 0x10000, scoped, tag = 'input window, operand 0']
    #allocation3 [shape = 's32[2]{0}', space=sflag, size = 0x8, scoped, tag = 'scoped memory for tpu_custom_call.1']
    %6 = vsyncpa [#allocation3], 0
    %s7 = scalar_lea.sflag [#allocation3], 1
    %8 = vsyncpa %s7, 0
    loop: start=0, step=1, limit=4
    $region2: #{tpu_custom_call.1} parent=1 // loop_pre_header
      _
    $region3: #{tpu_custom_call.1} parent=1 // loop_header
      %s10 = sphi 0, %s14
      %p11 = scmp.ge.s32.totalorder %s10, 4
      %s17 = sphi 0, %s29
      %s18 = sphi 0, %s25
      %s19 = sphi 0, %s17
      %s20 = sphi 0, %s18
      %s21 = sphi 0, %s19
      %s22 = sphi 0, %s20
      %s34 = sphi 0, %s36
      %s37 = sphi 0, %s34
      %s38 = sphi 0, %s37
      %s54 = sphi 0, %s38
      %s62 = sphi 0, %s64
      %s65 = sphi 0, %s62
      %s66 = sphi 0, %s65
      %s82 = sphi 0, %s66
    $region4: #{tpu_custom_call.1} parent=1 // loop_header_branch
      %13 = sbr.rel (%p11) target = $region8
    $region5: #{tpu_custom_call.1} parent=1 // loop_body
      %s15 = ssub.s32 %s10, 1
      %s16 = ssub.s32 %s10, 2
      %s23 = sadd.s32 1, %s18
      %p24 = scmp.ge.s32.totalorder %s23, 1
      %s25 = scalar_select %p24, 0, %s23
      %s26 = sadd.s32 1, %s17
      %s27 = scalar_select %p24, %s26, %s17
      %p28 = scmp.ge.s32.totalorder %s27, 2
      %s29 = scalar_select %p28, 0, %s27
      %s30 = ssub.s32 %s17, %s29
      %s31 = ssub.s32 %s18, %s25
      %s32 = sor.u32 %s30, %s31
      %p33 = scmp.eq.s32.totalorder %s32, 0
      %s35 = sadd.s32 %s34, 1
      %s36 = scalar_select %p33, %s34, %s35
      %p39 = pneg %p33
      %p40 = scmp.eq.s32.totalorder %s10, 1
      %p41 = por %p39, %p40
      %p42 = scmp.ne.s32.totalorder %s34, %s37
      %p43 = scmp.eq.s32.totalorder %s10, 0
      %p44 = por %p42, %p43
      %p45 = scmp.ne.s32.totalorder %s34, %s37
      %p46 = scmp.eq.s32.totalorder %s15, 1
      %p47 = por %p45, %p46
      %p48 = scmp.ne.s32.totalorder %s37, %s38
      %p49 = scmp.eq.s32.totalorder %s15, 0
      %p50 = por %p48, %p49
      %p51 = scmp.ne.s32.totalorder %s37, %s38
      %p52 = scmp.eq.s32.totalorder %s16, 1
      %p53 = por %p51, %p52
      %p55 = scmp.ne.s32.totalorder %s38, %s54
      %p56 = scmp.eq.s32.totalorder %s16, 0
      %p57 = por %p55, %p56
      %s58 = ssub.s32 %s17, %s29
      %s59 = ssub.s32 %s18, %s25
      %s60 = sor.u32 %s58, %s59
      %p61 = scmp.eq.s32.totalorder %s60, 0
      %s63 = sadd.s32 %s62, 1
      %s64 = scalar_select %p61, %s62, %s63
      %p67 = pneg %p61
      %p68 = scmp.eq.s32.totalorder %s10, 1
      %p69 = por %p67, %p68
      %p70 = scmp.ne.s32.totalorder %s62, %s65
      %p71 = scmp.eq.s32.totalorder %s10, 0
      %p72 = por %p70, %p71
      %p73 = scmp.ne.s32.totalorder %s62, %s65
      %p74 = scmp.eq.s32.totalorder %s15, 1
      %p75 = por %p73, %p74
      %p76 = scmp.ne.s32.totalorder %s65, %s66
      %p77 = scmp.eq.s32.totalorder %s15, 0
      %p78 = por %p76, %p77
      %p79 = scmp.ne.s32.totalorder %s65, %s66
      %p80 = scmp.eq.s32.totalorder %s16, 1
      %p81 = por %p79, %p80
      %p83 = scmp.ne.s32.totalorder %s66, %s82
      %p84 = scmp.eq.s32.totalorder %s16, 0
      %p85 = por %p83, %p84
      %p86 = scmp.le.s32.totalorder 1, %s10
      %p87 = scmp.lt.s32.totalorder %s10, 3
      %p88 = pnand %p86, %p87
      %p89 = pneg %p88
      // Predicated region
      $region9: #{tpu_custom_call.1} parent=5 // pred_check
        _
      $region10: #{tpu_custom_call.1} parent=5 // pred_check_branch
        %91 = sbr.rel (%p88) target = $region12
      $region11: #{tpu_custom_call.1} parent=5 // pred_region
        %s92 = ssub.s32 %s10, 1
      $region12: #{tpu_custom_call.1} parent=5 // pred_fallthru
        _
      %p93 = scmp.lt.s32.totalorder %s10, 2
      // Predicated region
      $region13: #{tpu_custom_call.1} parent=5 // pred_check
        %p94 = pneg %p93
      $region14: #{tpu_custom_call.1} parent=5 // pred_check_branch
        %96 = sbr.rel (%p94) target = $region16
      $region15: #{tpu_custom_call.1} parent=5 // pred_region
        // Predicated region
        $region17: #{tpu_custom_call.1} parent=15 // pred_check
          %p97 = pneg %p44
        $region18: #{tpu_custom_call.1} parent=15 // pred_check_branch
          %99 = sbr.rel (%p97) target = $region20
        $region19: #{tpu_custom_call.1} parent=15 // pred_region
          %s100 = sand.u32 %s34, 1
          %s101 = scalar_lea.sflag [#allocation3], %s100
          %s102 = sand.u32 %s34, 1
          %s103 = smul.addr %s102, 64
          %s104 = scalar_lea.vmem [#allocation2], %s103
          %s105 = smul.u32 4, %s18
          %s107 = ssub.s32 1024, 1024
          %108 = vsyncadd %s101, %s107
          %s109 = smul.addr %s105, 2
          %s110 = smul.addr %s17, 8
          %s111 = sadd.s32 %s109, %s110
          %s112 = smul.addr %s111, 128
          %s113 = scalar_lea.hbm %s0, %s112
          %s114 = sshll.u32 %s104, 4
          %s115 = int_to_ptr.vmem [resolvable:$true] %s114
          %120 = dma.hbm_to_vmem [thread:$0]  %s113, 1024, %s115, %s101, 128, 128, 8
        $region20: #{tpu_custom_call.1} parent=15 // pred_fallthru
          _
      $region16: #{tpu_custom_call.1} parent=5 // pred_fallthru
        _
      %p121 = scmp.le.s32.totalorder 1, %s10
      %p122 = scmp.lt.s32.totalorder %s10, 3
      %p123 = pnand %p121, %p122
      %p124 = pneg %p123
      // Predicated region
      $region21: #{tpu_custom_call.1} parent=5 // pred_check
        _
      $region22: #{tpu_custom_call.1} parent=5 // pred_check_branch
        %126 = sbr.rel (%p123) target = $region24
      $region23: #{tpu_custom_call.1} parent=5 // pred_region
        %s127 = ssub.s32 %s10, 1
        %s128 = sand.u32 %s37, 1
        %s129 = scalar_lea.sflag [#allocation3], %s128
        %s130 = sand.u32 %s37, 1
        %s131 = smul.addr %s130, 64
        %s132 = scalar_lea.vmem [#allocation2], %s131
        // Predicated region
        $region25: #{tpu_custom_call.1} parent=23 // pred_check
          %p133 = pneg %p50
        $region26: #{tpu_custom_call.1} parent=23 // pred_check_branch
          %135 = sbr.rel (%p133) target = $region28
        $region27: #{tpu_custom_call.1} parent=23 // pred_region
          %136 = dma.done %s129, 1024
        $region28: #{tpu_custom_call.1} parent=23 // pred_fallthru
          _
        %s137 = sand.u32 %s37, 1
        %s138 = scalar_lea.sflag [#allocation3], %s137
        %s139 = sand.u32 %s37, 1
        %s140 = smul.addr %s139, 64
        %s141 = scalar_lea.vmem [#allocation2], %s140
        %p142 = pneg %p50
        %p143 = pneg %p47
        %p144 = pneg %p78
        %p145 = pneg %p75
        %s146 = smul.u32 4, %s20
        %p147 = scmp.lt.s32.totalorder %s19, 1
        %s148 = scalar_select %p147, %s19, 1
        %p149 = scmp.lt.s32.totalorder %s146, 3
        %s150 = scalar_select %p149, %s146, 3
        %s151 = smul.addr %s150, 2
        %s152 = smul.addr %s148, 8
        %s153 = sadd.s32 %s151, %s152
        %s154 = smul.addr %s153, 8
        %s155 = scalar_lea.vmem %s1, %s154
        %s156 = smul.u32 4, %s20
        %s157 = smul.u32 4, %s20
        %p158 = scmp.lt.s32.totalorder %s19, 1
        %s159 = scalar_select %p158, %s19, 1
        %p160 = scmp.lt.s32.totalorder %s157, 3
        %s161 = scalar_select %p160, %s157, 3
        %s162 = smul.addr %s161, 2
        %s163 = smul.addr %s159, 8
        %s164 = sadd.s32 %s162, %s163
        %s165 = smul.addr %s164, 8
        %s166 = scalar_lea.vmem %s1, %s165
        %s167 = smul.u32 4, %s20
        %v168 = vld [vmem:[%s132 + $0x1] sm:$0xff]
        %v169 = vld [vmem:[%s132 + $0x9] sm:$0x7f]
        %v170 = vld [vmem:[%s132 + $0x11] sm:$0xff]
        %v171 = vld [vmem:[%s132 + $0x19] sm:$0x7f]
        %v172 = vld [vmem:[%s132 + $0x21] sm:$0xff]
        %v173 = vld [vmem:[%s132 + $0x29] sm:$0x7f]
        %v174 = vld [vmem:[%s132 + $0x31] sm:$0xff]
        %v175 = vld [vmem:[%s132 + $0x39] sm:$0x7f]
        %184 = vrot.lane.b32.xlu0 %v168, 127
        %v185 = vpop.permute.xlu0 %184
        %186 = vrot.lane.b32.xlu0 %v169, 127
        %v187 = vpop.permute.xlu0 %186
        %188 = vrot.lane.b32.xlu0 %v170, 127
        %v189 = vpop.permute.xlu0 %188
        %190 = vrot.lane.b32.xlu0 %v171, 127
        %v191 = vpop.permute.xlu0 %190
        %192 = vrot.lane.b32.xlu0 %v172, 127
        %v193 = vpop.permute.xlu0 %192
        %194 = vrot.lane.b32.xlu0 %v173, 127
        %v195 = vpop.permute.xlu0 %194
        %196 = vrot.lane.b32.xlu0 %v174, 127
        %v197 = vpop.permute.xlu0 %196
        %198 = vrot.lane.b32.xlu0 %v175, 127
        %v199 = vpop.permute.xlu0 %198
        %vm208 = vcmask 121856
        %209 = vst.msk [vmem:[%s166] sm:$0xff] %vm208, %v185
        %vm210 = vcmask 120832
        %211 = vst.msk [vmem:[%s166 + $0x8] sm:$0x7f] %vm210, %v187
        %212 = vst.msk [vmem:[%s166 + $0x10] sm:$0xff] %vm208, %v189
        %213 = vst.msk [vmem:[%s166 + $0x18] sm:$0x7f] %vm210, %v191
        %214 = vst.msk [vmem:[%s166 + $0x20] sm:$0xff] %vm208, %v193
        %215 = vst.msk [vmem:[%s166 + $0x28] sm:$0x7f] %vm210, %v195
        %216 = vst.msk [vmem:[%s166 + $0x30] sm:$0xff] %vm208, %v197
        %217 = vst.msk [vmem:[%s166 + $0x38] sm:$0x7f] %vm210, %v199
        %s218 = smul.u32 4, %s20
        %p219 = scmp.lt.s32.totalorder %s19, 1
        %s220 = scalar_select %p219, %s19, 1
        %p221 = scmp.lt.s32.totalorder %s218, 3
        %s222 = scalar_select %p221, %s218, 3
        %s223 = smul.addr %s222, 2
        %s224 = smul.addr %s220, 8
        %s225 = sadd.s32 %s223, %s224
        %s226 = smul.addr %s225, 8
        %s227 = scalar_lea.vmem %s1, %s226
        // Predicated region
        $region29: #{tpu_custom_call.1} parent=23 // pred_check
          %p228 = pneg %p75
        $region30: #{tpu_custom_call.1} parent=23 // pred_check_branch
          %230 = sbr.rel (%p228) target = $region32
        $region31: #{tpu_custom_call.1} parent=23 // pred_region
          %s231 = smul.u32 4, %s20
        $region32: #{tpu_custom_call.1} parent=23 // pred_fallthru
          _
      $region24: #{tpu_custom_call.1} parent=5 // pred_fallthru
        _
      %p232 = scmp.le.s32.totalorder 2, %s10
      // Predicated region
      $region33: #{tpu_custom_call.1} parent=5 // pred_check
        %p233 = pneg %p232
      $region34: #{tpu_custom_call.1} parent=5 // pred_check_branch
        %235 = sbr.rel (%p233) target = $region36
      $region35: #{tpu_custom_call.1} parent=5 // pred_region
        %s236 = ssub.s32 %s10, 2
        // Predicated region
        $region37: #{tpu_custom_call.1} parent=35 // pred_check
          %p237 = pneg %p81
        $region38: #{tpu_custom_call.1} parent=35 // pred_check_branch
          %239 = sbr.rel (%p237) target = $region40
        $region39: #{tpu_custom_call.1} parent=35 // pred_region
          %s240 = smul.u32 4, %s22
          %p241 = scmp.lt.s32.totalorder %s21, 1
          %s242 = scalar_select %p241, %s21, 1
          %p243 = scmp.lt.s32.totalorder %s240, 3
          %s244 = scalar_select %p243, %s240, 3
          %s245 = smul.addr %s244, 2
          %s246 = smul.addr %s242, 8
          %s247 = sadd.s32 %s245, %s246
          %s248 = smul.addr %s247, 8
          %s249 = scalar_lea.vmem %s1, %s248
        $region40: #{tpu_custom_call.1} parent=35 // pred_fallthru
          _
      $region36: #{tpu_custom_call.1} parent=5 // pred_fallthru
        _
    $region6: #{tpu_custom_call.1} parent=1 // loop_footer
      %s14 = sadd.s32 1, %s10
    $region7: #{tpu_custom_call.1} parent=1 // loop_footer_branch
      %9 = sbr.rel target = $region3
    $region8: #{tpu_custom_call.1} parent=1 // loop_exit
      _
    %250 = vsyncpa [#allocation3], 1
    %s251 = scalar_lea.sflag [#allocation3], 1
    %252 = vsyncpa %s251, 1

</llo_original>
